<compile_context>
chip_gen: v6e
topology: v6e:2x2x1
jax: 0.10.0
libtpu: 0.0.40
codegen_flags: <defaults>
</compile_context>

<pallas_src>
import functools

import jax
import jax.numpy as jnp
from jax import lax
from jax.experimental import pallas as pl
from jax.experimental.pallas import tpu as pltpu

_MIB = 1024 * 1024


def _round_up(v, m):
    return ((v + m - 1) // m) * m


def _vmem_budget():
    """Returns (tile budget bytes, physical VMEM bytes) with generation headroom."""
    phys = 64 * _MIB                      # conservative fallback (v7x: 64 MiB/TC)
    try:
        phys = int(getattr(pltpu.get_tpu_info(), "vmem_capacity_bytes", phys))
    except Exception:
        pass
    # ~45 MiB on v7x (64 MiB physical), 48 MiB on v5e/v6e (128 MiB physical).
    budget = min(int(phys * 0.70), 48 * _MIB)
    return budget, phys


def _choose_tm(N, d_blk, c_vmem, x_item, c_item, out_item, budget, *, ktiled):
    """Largest row tile whose total double-buffered VMEM footprint fits `budget`.

    Counts x tile (x2 buffers), output tile (x2), centers block (x2), csq (x2)
    and, in the K-tiled path, the f32 accumulator scratch.  Footprints use
    lane-rounded (last dim -> 128) sizes, matching physical VMEM layout.
    """
    d_lanes = _round_up(d_blk, 128)
    fixed = 2 * _round_up(d_blk, 8) * c_vmem * c_item + 2 * c_vmem * 4
    per_row = 2 * d_lanes * x_item + 2 * c_vmem * out_item + (c_vmem * 4 if ktiled else 0)
    tm = (budget - fixed) // per_row if budget > fixed else 8
    tm = max(8, min(1024, (int(tm) // 8) * 8))
    tm = min(tm, _round_up(N, 8))
    return tm


def _dce_kernel_simple(x_ref, c_ref, csq_ref, out_ref):
    """feat_dim fits in one block: one MXU matmul + row norm + fused subtract."""
    x = x_ref[...]                                                     # (tm, D)
    x32 = x.astype(jnp.float32)
    x_sq = jnp.sum(x32 * x32, axis=1, keepdims=True)                   # (tm, 1) f32
    xc = jnp.dot(x, c_ref[...], preferred_element_type=jnp.float32)    # (tm, C) f32, MXU
    # -dist = 2*x@c - |x|^2 - |c|^2 ; the *2 rides spare VALU slots.
    out_ref[...] = (2.0 * xc - x_sq - csq_ref[...]).astype(out_ref.dtype)


def _dce_kernel_ktiled(x_ref, c_ref, csq_ref, out_ref, acc_ref, *, d_total, tk):
    """feat_dim streamed over grid axis 1 ("arbitrary") with an f32 accumulator."""
    k = pl.program_id(1)

    @pl.when(k == 0)
    def _():
        acc_ref[...] = jnp.zeros_like(acc_ref)

    x = x_ref[...]                                                     # (tm, tk)
    if d_total % tk != 0:
        # Ragged K tail: out-of-bounds x columns may hold stale VMEM garbage ->
        # zero them so neither the row norm nor the matmul sees them (centers
        # rows were zero-padded in the wrapper).
        col = lax.broadcasted_iota(jnp.int32, x.shape, 1)
        x = jnp.where(col < (d_total - k * tk), x, jnp.zeros_like(x))
    x32 = x.astype(jnp.float32)
    x_sq = jnp.sum(x32 * x32, axis=1, keepdims=True)                   # partial |x|^2
    xc = jnp.dot(x, c_ref[...], preferred_element_type=jnp.float32)    # (tm, C) f32
    acc_ref[...] += 2.0 * xc - x_sq

    @pl.when(k == pl.num_programs(1) - 1)
    def _():
        out_ref[...] = (acc_ref[...] - csq_ref[...]).astype(out_ref.dtype)


def dce_loss_forward(x, centers, *, tk=None):
    """Pallas TPU forward of dce_loss: returns (centers, -dist)."""
    N, D = x.shape
    D2, C = centers.shape
    assert D == D2, "feat_dim mismatch between x and centers"

    out_dtype = jnp.promote_types(x.dtype, centers.dtype)
    x_item = jnp.dtype(x.dtype).itemsize
    c_item = jnp.dtype(centers.dtype).itemsize
    out_item = jnp.dtype(out_dtype).itemsize
    c_vmem = _round_up(C, 128)                     # lane-rounded VMEM width of class axis

    budget, phys = _vmem_budget()

    # Hoisted centers-side work: one tiny pass over the small centers matrix.
    csq = jnp.sum(centers.astype(jnp.float32) ** 2, axis=0, keepdims=True)   # (1, C) f32

    # Decide whether the (D, C) centers block stays resident in VMEM or is
    # streamed over a K (feat_dim) grid axis.
    if tk is None:
        tk = D
        if D > 128 and 2 * _round_up(D, 8) * c_vmem * c_item > budget // 2:
            tk = 128
            while tk * 2 < D and 2 * (tk * 2) * c_vmem * c_item <= budget // 4:
                tk *= 2
    tk = min(int(tk), D)
    ktiled = tk != D

    if not ktiled:
        tm = _choose_tm(N, D, c_vmem, x_item, c_item, out_item, budget, ktiled=False)
        grid = (pl.cdiv(N, tm),)
        kernel = _dce_kernel_simple
        in_specs = [
            pl.BlockSpec((tm, D), lambda i: (i, 0)),      # x row tile (streamed, double-buffered)
            pl.BlockSpec((D, C), lambda i: (0, 0)),       # centers (resident, fetched once)
            pl.BlockSpec((1, C), lambda i: (0, 0)),       # |centers|^2 (resident)
        ]
        out_specs = pl.BlockSpec((tm, C), lambda i: (i, 0))
        scratch_shapes = []
        dim_sem = ("parallel",)
        c_in = centers
        needed = (2 * tm * _round_up(D, 128) * x_item + 2 * tm * c_vmem * out_item
                  + 2 * _round_up(D, 8) * c_vmem * c_item + 2 * c_vmem * 4)
    else:
        assert tk % 128 == 0, "K tile must be a multiple of 128 lanes"
        Dk = _round_up(D, tk)
        # Zero-pad centers rows (cheap: centers are tiny next to the x stream) so
        # the ragged K tail never multiplies stale VMEM garbage into valid output.
        c_in = jnp.pad(centers, ((0, Dk - D), (0, 0))) if Dk != D else centers
        tm = _choose_tm(N, tk, c_vmem, x_item, c_item, out_item, budget, ktiled=True)
        grid = (pl.cdiv(N, tm), Dk // tk)
        kernel = functools.partial(_dce_kernel_ktiled, d_total=D, tk=tk)
        in_specs = [
            pl.BlockSpec((tm, tk), lambda i, k: (i, k)),   # x tile (streamed)
            pl.BlockSpec((tk, C), lambda i, k: (k, 0)),    # centers K slab (streamed)
            pl.BlockSpec((1, C), lambda i, k: (0, 0)),     # |centers|^2 (resident)
        ]
        out_specs = pl.BlockSpec((tm, C), lambda i, k: (i, 0))
        scratch_shapes = [pltpu.VMEM((tm, C), jnp.float32)]
        dim_sem = ("parallel", "arbitrary")
        needed = (2 * tm * tk * x_item + 2 * tm * c_vmem * out_item
                  + 2 * tk * c_vmem * c_item + 2 * c_vmem * 4 + tm * c_vmem * 4)

    vmem_limit = int(min(phys * 0.85, max(32 * _MIB, needed + 8 * _MIB)))

    neg_dist = pl.pallas_call(
        kernel,
        out_shape=jax.ShapeDtypeStruct((N, C), out_dtype),
        grid_spec=pltpu.PrefetchScalarGridSpec(
            num_scalar_prefetch=0,
            grid=grid,
            in_specs=in_specs,
            out_specs=out_specs,
            scratch_shapes=scratch_shapes,
        ),
        compiler_params=pltpu.CompilerParams(
            dimension_semantics=dim_sem,
            vmem_limit_bytes=vmem_limit,
        ),
        cost_estimate=pl.CostEstimate(
            flops=2 * N * D * C,
            bytes_accessed=(N * D * x_item + c_in.shape[0] * C * c_item
                            + C * 4 + N * C * out_item),
            transcendentals=0,
        ),
    )(x, c_in, csq)

    return centers, neg_dist


def _reference(x, centers):
    x32 = x.astype(jnp.float32)
    c32 = centers.astype(jnp.float32)
    x_sq = jnp.sum(x32 ** 2, axis=1, keepdims=True)
    c_sq = jnp.sum(c32 ** 2, axis=0, keepdims=True)
    dist = x_sq + c_sq - 2.0 * (x32 @ c32)
    return centers, -dist


if __name__ == "__main__":
    key = jax.random.PRNGKey(0)
    k_x, k_c, k_x2, k_x3, k_c3 = jax.random.split(key, 5)

    # Shapes consistent with the module: x (N, feat_dim), centers (feat_dim, n_classes).
    N, feat_dim, n_classes = 8, 32, 4
    x = jax.random.normal(k_x, (N, feat_dim), dtype=jnp.float32)
    centers = jax.random.normal(k_c, (feat_dim, n_classes), dtype=jnp.float32)

    out_centers, neg_dist = dce_loss_forward(x, centers)
    jax.block_until_ready(neg_dist)
    _, ref_neg_dist = _reference(x, centers)
    assert neg_dist.shape == ref_neg_dist.shape
    assert jnp.allclose(neg_dist.astype(jnp.float32), ref_neg_dist,
                        atol=1e-4, rtol=1e-4), "mismatch vs reference"
    assert jnp.array_equal(out_centers, centers)

    # Ragged row tile: N not a multiple of the tile size (no wrapper pad, Pallas masks).
    N2 = 100
    x2 = jax.random.normal(k_x2, (N2, feat_dim), dtype=jnp.float32)
    _, neg_dist2 = dce_loss_forward(x2, centers)
    jax.block_until_ready(neg_dist2)
    _, ref2 = _reference(x2, centers)
    assert jnp.allclose(neg_dist2.astype(jnp.float32), ref2,
                        atol=1e-4, rtol=1e-4), "mismatch (ragged rows)"

    # Forced K-tiled path: feat_dim streamed over a reduction grid axis with a
    # ragged tail (exercises the accumulator + in-kernel mask).
    N3, D3, C3 = 64, 200, 7
    x3 = jax.random.normal(k_x3, (N3, D3), dtype=jnp.float32)
    c3 = jax.random.normal(k_c3, (D3, C3), dtype=jnp.float32)
    _, neg_dist3 = dce_loss_forward(x3, c3, tk=128)
    jax.block_until_ready(neg_dist3)
    _, ref3 = _reference(x3, c3)
    assert jnp.allclose(neg_dist3.astype(jnp.float32), ref3,
                        atol=5e-3, rtol=5e-3), "mismatch (K-tiled)"

    print("KERNEL_OK")
</pallas_src>

<mosaic_0001>
module attributes {stable_mosaic.version = 11 : i64} {
  func.func @_dce_kernel_simple(%arg0: i32, %arg1: memref<8x32xf32, #tpu.memory_space<vmem>>, %arg2: memref<32x4xf32, #tpu.memory_space<vmem>>, %arg3: memref<1x4xf32, #tpu.memory_space<vmem>>, %arg4: memref<8x4xf32, #tpu.memory_space<vmem>>) attributes {dimension_semantics = [#tpu.dimension_semantics<parallel>], iteration_bounds = array<i64: 1>, scalar_prefetch = 0 : i64, scratch_operands = 0 : i64, tpu.core_type = #tpu.core_type<tc>, window_params = [{transform_indices = @transform_0, window_bounds = array<i64: 8, 32>}, {pipeline_mode = #tpu.pipeline_mode<synchronous>, transform_indices = @transform_1, window_bounds = array<i64: 32, 4>}, {pipeline_mode = #tpu.pipeline_mode<synchronous>, transform_indices = @transform_2, window_bounds = array<i64: 1, 4>}, {transform_indices = @transform_3, window_bounds = array<i64: 8, 4>}]} {
    %c0 = arith.constant 0 : index
    %c0_0 = arith.constant 0 : index
    %0 = vector.load %arg1[%c0, %c0_0] : memref<8x32xf32, #tpu.memory_space<vmem>>, vector<8x32xf32>
    %1 = arith.mulf %0, %0 : vector<8x32xf32>
    %cst = arith.constant dense<0.000000e+00> : vector<8xf32>
    %2 = vector.multi_reduction <add>, %1, %cst [1] : vector<8x32xf32> to vector<8xf32>
    %3 = vector.shape_cast %2 : vector<8xf32> to vector<8x1xf32>
    %c0_1 = arith.constant 0 : index
    %c0_2 = arith.constant 0 : index
    %4 = vector.load %arg2[%c0_1, %c0_2] : memref<32x4xf32, #tpu.memory_space<vmem>>, vector<32x4xf32>
    %cst_3 = arith.constant dense<0.000000e+00> : vector<8x4xf32>
    %5 = tpu.matmul %0, %4, %cst_3 {dimension_numbers = #tpu.dot_dimension_numbers<[1], [0], [0], [1], [0, 0, 1, 1], [], []>} : vector<8x32xf32>, vector<32x4xf32>, vector<8x4xf32> -> vector<8x4xf32>
    %cst_4 = arith.constant 2.000000e+00 : f32
    %6 = vector.broadcast %cst_4 : f32 to vector<8x4xf32>
    %7 = arith.mulf %6, %5 : vector<8x4xf32>
    %8 = vector.broadcast %3 : vector<8x1xf32> to vector<8x4xf32>
    %9 = arith.subf %7, %8 : vector<8x4xf32>
    %c0_5 = arith.constant 0 : index
    %c0_6 = arith.constant 0 : index
    %10 = vector.load %arg3[%c0_5, %c0_6] : memref<1x4xf32, #tpu.memory_space<vmem>>, vector<1x4xf32>
    %11 = vector.broadcast %10 : vector<1x4xf32> to vector<8x4xf32>
    %12 = arith.subf %9, %11 : vector<8x4xf32>
    %c0_7 = arith.constant 0 : index
    %c0_8 = arith.constant 0 : index
    %13 = vector.load %arg4[%c0_7, %c0_8] : memref<8x4xf32, #tpu.memory_space<vmem>>, vector<8x4xf32>
    tpu.vector_store %arg4[%c0_7, %c0_8], %12 {strides = array<i32>} : memref<8x4xf32, #tpu.memory_space<vmem>>, vector<8x4xf32>,
    return
  }
  func.func @transform_0(%arg0: i32) -> (i32, i32) {
    %c0_i32 = arith.constant 0 : i32
    %c0_i32_0 = arith.constant 0 : i32
    return %arg0, %c0_i32 : i32, i32
  }
  func.func @transform_1(%arg0: i32) -> (i32, i32) {
    %c0_i32 = arith.constant 0 : i32
    %c0_i32_0 = arith.constant 0 : i32
    %c0_i32_1 = arith.constant 0 : i32
    return %c0_i32, %c0_i32_0 : i32, i32
  }
  func.func @transform_2(%arg0: i32) -> (i32, i32) {
    %c0_i32 = arith.constant 0 : i32
    %c0_i32_0 = arith.constant 0 : i32
    %c0_i32_1 = arith.constant 0 : i32
    return %c0_i32, %c0_i32_0 : i32, i32
  }
  func.func @transform_3(%arg0: i32) -> (i32, i32) {
    %c0_i32 = arith.constant 0 : i32
    %c0_i32_0 = arith.constant 0 : i32
    return %arg0, %c0_i32 : i32, i32
  }
}

</mosaic_0001>

<llo_original>
// kernel: tpu_custom_call.1
$region0: #{tpu_custom_call.1}
  #allocation0 [shape = 'u32[]', space=smem, size = 0x4, offset = 0x4, fixed_abs, tag = 'smem constant byte address 0x4 - core index']
  #allocation1 [shape = 'u32[144,128]{1,0:T(1,128)}', space=vmem, size = 0x12000, scoped, tag = 'internal scratch']
  %s0 = inlined_call_operand.vmem [shape: f32[8,32], index: 0, kind: input, shape index: {}]
  %s1 = inlined_call_operand.vmem [shape: f32[32,4], index: 1, kind: input, shape index: {}]
  %s2 = inlined_call_operand.vmem [shape: f32[1,4], index: 2, kind: input, shape index: {}]
  %s3 = inlined_call_operand.vmem [shape: f32[8,4], index: 3, kind: output, shape index: {}]
  %s4 = sld [smem:[#allocation0]]
  $region22: #{tpu_custom_call.1} parent=0
    _
  %s6 = ssub.s32 1, %s4
  %s7 = scalar_select 0, %s6, %s4
  // Predicated region
  $region2: #{tpu_custom_call.1} parent=0 // pred_check
    _
  $region3: #{tpu_custom_call.1} parent=0 // pred_check_branch
    %9 = sbr.rel (0) target = $region5
  $region4: #{tpu_custom_call.1} parent=0 // pred_region
    _
  $region5: #{tpu_custom_call.1} parent=0 // pred_fallthru
    _
  // Predicated region
  $region6: #{tpu_custom_call.1} parent=0 // pred_check
    _
  $region7: #{tpu_custom_call.1} parent=0 // pred_check_branch
    %11 = sbr.rel (0) target = $region9
  $region8: #{tpu_custom_call.1} parent=0 // pred_region
    _
  $region9: #{tpu_custom_call.1} parent=0 // pred_fallthru
    _
  // Predicated region
  $region10: #{tpu_custom_call.1} parent=0 // pred_check
    _
  $region11: #{tpu_custom_call.1} parent=0 // pred_check_branch
    %13 = sbr.rel (0) target = $region13
  $region12: #{tpu_custom_call.1} parent=0 // pred_region
    _
  $region13: #{tpu_custom_call.1} parent=0 // pred_fallthru
    _
  %v14 = vld [vmem:[%s0] sm:$0xff]
  %v15 = vmul.f32 %v14, %v14
  %vm16 = vcmask 261120
  %v17 = vsel %vm16, %v15, 0.0
  %18 = vadd.xlane.f32.xlu0 %v17
  %v19 = vpop.xlane.xlu0 %18
  %v20 = vld [vmem:[%s1] sm:$0xff]
  %v21 = vld [vmem:[%s1 + $0x8] sm:$0xff]
  %v22 = vld [vmem:[%s1 + $0x10] sm:$0xff]
  %v23 = vld [vmem:[%s1 + $0x18] sm:$0xff]
  %v25 = vsel %vm16, %v14, 0
  %27 = vmatprep.subr.mxu0 0.0
  %28 = vmatpush1.msra.mxu0 0.0
  %29 = vmatprep.subr.mxu0 0.0
  %30 = vmatpush1.msra.mxu0 0.0
  %31 = vmatprep.subr.mxu0 0.0
  %32 = vmatpush1.msra.mxu0 0.0
  %33 = vmatprep.subr.mxu0 0.0
  %34 = vmatpush1.msra.mxu0 0.0
  %35 = vmatprep.subr.mxu0 0.0
  %36 = vmatpush1.msra.mxu0 0.0
  %37 = vmatprep.subr.mxu0 0.0
  %38 = vmatpush1.msra.mxu0 0.0
  %39 = vmatprep.subr.mxu0 0.0
  %40 = vmatpush1.msra.mxu0 0.0
  %41 = vmatprep.subr.mxu0 0.0
  %42 = vmatpush1.msra.mxu0 0.0
  %43 = vmatprep.subr.mxu0 0.0
  %44 = vmatpush1.msra.mxu0 0.0
  %45 = vmatprep.subr.mxu0 0.0
  %46 = vmatpush1.msra.mxu0 0.0
  %47 = vmatprep.subr.mxu0 0.0
  %48 = vmatpush1.msra.mxu0 0.0
  %49 = vmatprep.subr.mxu0 0.0
  %50 = vmatpush1.msra.mxu0 0.0
  %51 = vmatprep.subr.mxu0 0.0
  %52 = vmatpush1.msra.mxu0 %v23
  %53 = vmatprep.subr.mxu0 0.0
  %54 = vmatpush1.msra.mxu0 %v22
  %55 = vmatprep.subr.mxu0 0.0
  %56 = vmatpush1.msra.mxu0 %v21
  %57 = vmatprep.subr.mxu0 0.0
  %58 = vmatpush1.msra.mxu0 %v20
  %59 = vmatprep.subr.mxu0 0.0
  %60 = vmatpush2.msra.mxu0 0.0
  %61 = vmatprep.subr.mxu0 0.0
  %62 = vmatpush2.msra.mxu0 0.0
  %63 = vmatprep.subr.mxu0 0.0
  %64 = vmatpush2.msra.mxu0 0.0
  %65 = vmatprep.subr.mxu0 0.0
  %66 = vmatpush2.msra.mxu0 0.0
  %67 = vmatprep.subr.mxu0 0.0
  %68 = vmatpush2.msra.mxu0 0.0
  %69 = vmatprep.subr.mxu0 0.0
  %70 = vmatpush2.msra.mxu0 0.0
  %71 = vmatprep.subr.mxu0 0.0
  %72 = vmatpush2.msra.mxu0 0.0
  %73 = vmatprep.subr.mxu0 0.0
  %74 = vmatpush2.msra.mxu0 0.0
  %75 = vmatprep.subr.mxu0 0.0
  %76 = vmatpush2.msra.mxu0 0.0
  %77 = vmatprep.subr.mxu0 0.0
  %78 = vmatpush2.msra.mxu0 0.0
  %79 = vmatprep.subr.mxu0 0.0
  %80 = vmatpush2.msra.mxu0 0.0
  %81 = vmatprep.subr.mxu0 0.0
  %82 = vmatpush2.msra.mxu0 0.0
  %83 = vmatprep.subr.mxu0 0.0
  %84 = vmatpush2.msra.mxu0 0.0
  %85 = vmatprep.subr.mxu0 0.0
  %86 = vmatpush2.msra.mxu0 0.0
  %87 = vmatprep.subr.mxu0 0.0
  %88 = vmatpush2.msra.mxu0 0.0
  %89 = vmatprep.subr.mxu0 0.0
  %90 = vmatpush2.msra.mxu0 0.0
  %91 = vmatprep.mubr.f32.mxu0 0.0
  %92 = vmatmul.mubr.f32.gmra.mxu0 %v25
  %v93 = vpop.f32.mrf.mxu0
  %v94 = vadd.f32 0.0, %v93
  %v95 = vpop.f32.mrf.mxu0
  %96 = vdwg.mxu0
  %v97 = vmul.f32 %v94, 2.0
  %v98 = vsub.f32 %v97, %v19
  %v99 = vld [vmem:[%s2] sm:$0x1]
  %v101 = vlaneseq
  %v102 = vshrl.u32 %v101, 7
  %v103 = vsub.s32 0, %v102
  %v104 = vrot.slane %v99, %v103
  %v106 = vsub.f32 %v98, %v104
  %vm107 = vcmask 31744
  %108 = vst.msk [vmem:[%s3] sm:$0xff] %vm107, %v106
  // Predicated region
  $region14: #{tpu_custom_call.1} parent=0 // pred_check
    _
  $region15: #{tpu_custom_call.1} parent=0 // pred_check_branch
    %110 = sbr.rel (0) target = $region17
  $region16: #{tpu_custom_call.1} parent=0 // pred_region
    _
  $region17: #{tpu_custom_call.1} parent=0 // pred_fallthru
    _
  // Predicated region
  $region18: #{tpu_custom_call.1} parent=0 // pred_check
    _
  $region19: #{tpu_custom_call.1} parent=0 // pred_check_branch
    %112 = sbr.rel (0) target = $region21
  $region20: #{tpu_custom_call.1} parent=0 // pred_region
    _
  $region21: #{tpu_custom_call.1} parent=0 // pred_fallthru
    _

</llo_original>
